<compile_context>
chip_gen: v7x
topology: tpu7x:2x2x1
jax: 0.10.0
libtpu: 0.0.40
codegen_flags: <defaults>
</compile_context>

<pallas_src>
import jax
import jax.numpy as jnp
from jax.experimental import pallas as pl
from jax.experimental.pallas import tpu as pltpu

N_CHANNELS = 4          # n_channels
WINDOW_SIZE = 16        # window_size
N_CLASSES = 6           # n_classes
BN_EPS = 1e-5

K_MAX = 5               # both branches evaluated with a k=5 window (k=3 zero-lifted)
PAD = 2                 # matching padding (= int(5/2))
N_FILTERS = 8           # filters per conv branch
N_BRANCH_CH = 2 * N_FILTERS   # 16 channels after fusing both branches
L_POOL = WINDOW_SIZE // 2     # 8 (MaxPool1d(2) output length)
HIDDEN = 128
FLAT_DIM = N_FILTERS * L_POOL  # 64

# -------- packed parameter slab layout (single DMA), width = 16 lanes --------
_R_WCONV = 0                       # rows [0, 20)  : im2col conv weight (20, 16)
_R_BCONV = K_MAX * N_CHANNELS      # row 20        : conv bias (16)
_R_GAMMA = _R_BCONV + 1            # row 21        : BN gamma (16)
_R_BETA = _R_GAMMA + 1             # row 22        : BN beta (16)
_R_BHEAD = _R_BETA + 1             # row 23        : folded head bias (6, zero-padded)
_R_WHEAD = _R_BHEAD + 1            # rows [24, 88) : folded head weight (64, 6, zero-padded)
SLAB_ROWS = _R_WHEAD + FLAT_DIM    # 88


def _vmem_spec():
    # whole array resident in VMEM (shapes here are tiny; no pipelining needed)
    return pl.BlockSpec(memory_space=pltpu.MemorySpace.VMEM)


# --------------------------------------------------------------------------
# Fully fused forward kernel
# --------------------------------------------------------------------------
def nasnet_fused_kernel(x_ref, p_ref, o_ref):
    """x_ref : (B, Cin, L)      raw NCL input (as PyTorch sees it)
       p_ref : (88, 16)         packed parameter slab (see layout above)
       o_ref : (B, n_classes)   logits"""
    B = x_ref.shape[0]
    L = WINDOW_SIZE
    Cin = N_CHANNELS

    # --- static views into the single packed parameter slab (one DMA total)
    wc = p_ref[_R_WCONV:_R_BCONV, :]        # (20, 16) im2col weight, both branches
    b_conv = p_ref[_R_BCONV:_R_GAMMA, :]    # (1, 16)
    gamma = p_ref[_R_GAMMA:_R_BETA, :]      # (1, 16)
    beta = p_ref[_R_BETA:_R_BHEAD, :]       # (1, 16)
    b_head = p_ref[_R_BHEAD:_R_WHEAD, :]    # (1, 16)  cols >= n_classes are zero
    w_head = p_ref[_R_WHEAD:SLAB_ROWS, :]   # (64, 16) cols >= n_classes are zero

    # --- zero-pad the length axis in registers (lane concat in NCL), then
    #     one NCL -> NLC transpose: no VMEM scratch round-trip.
    zpad = jnp.zeros((B, Cin, PAD), jnp.float32)
    xpad_ncl = jnp.concatenate([zpad, x_ref[...], zpad], axis=-1)   # (B, Cin, L+4)
    xp = jnp.transpose(xpad_ncl, (0, 2, 1))                         # (B, L+4, Cin)

    # --- im2col -> ONE 2D MXU push covering BOTH conv branches
    patches = jnp.concatenate([xp[:, k:k + L, :] for k in range(K_MAX)],
                              axis=-1)                              # (B, L, 20)
    patches2d = patches.reshape(B * L, K_MAX * Cin)                 # (B*L, 20)
    y = jnp.dot(patches2d, wc, preferred_element_type=jnp.float32)  # (B*L, 16)
    y = jnp.maximum(y + b_conv, 0.0)                                # conv bias + ReLU

    # --- BatchNorm1d (training-mode batch stats): per-channel mean / biased
    #     var over (B, L); single pass, variance clamped to >= 0.
    n = float(B * L)
    s = jnp.sum(y, axis=0, keepdims=True)                           # (1, 16)
    ss = jnp.sum(y * y, axis=0, keepdims=True)                      # (1, 16)
    mean = s / n
    var = jnp.maximum(ss / n - mean * mean, 0.0)
    inv = jax.lax.rsqrt(var + BN_EPS)
    ybn = (y - mean) * (inv * gamma) + beta                         # (B*L, 16)

    # --- ElementwiseAdd of the two conv branches (channel halves)
    z2 = ybn[:, :N_FILTERS] + ybn[:, N_FILTERS:]                    # (B*L, 8)
    z = z2.reshape(B, L, N_FILTERS)                                 # (B, L, 8)

    # --- MaxPool1d(2) fused with the flatten: pooled windows concatenated
    #     along lanes in L-major / channel-fast order (flat[b, l*8 + c]);
    #     the folded head weight rows were permuted at prep time to match.
    pooled = jnp.concatenate(
        [jnp.maximum(z[:, 2 * i:2 * i + 1, :], z[:, 2 * i + 1:2 * i + 2, :])
         for i in range(L_POOL)], axis=-1)                          # (B, 1, 64)
    flat = jnp.sum(pooled, axis=1)                                  # (B, 64)

    # --- folded classifier head: MLP1 -> MLP2 -> output collapsed into one
    #     (B, 64) @ (64, 16) matmul (+ bias); only the first 6 lanes are real.
    out = jnp.dot(flat, w_head, preferred_element_type=jnp.float32) + b_head
    o_ref[...] = out[:, :N_CLASSES].astype(o_ref.dtype)


def nasnet_forward(x, param_slab):
    """Full NASNet forward for the fixed architecture above.  `param_slab` is
    the packed parameter slab from prepare_params (built once, outside jit)."""
    B = x.shape[0]
    x = x.reshape(B, N_CHANNELS, WINDOW_SIZE)      # as in NASNet.forward (NCL)
    return pl.pallas_call(
        nasnet_fused_kernel,
        out_shape=jax.ShapeDtypeStruct((B, N_CLASSES), jnp.float32),
        in_specs=[_vmem_spec(), _vmem_spec()],
        out_specs=_vmem_spec(),
    )(x, param_slab)


# --------------------------------------------------------------------------
# One-time (outside jit) parameter re-layout into the packed slab
# --------------------------------------------------------------------------
def prepare_params(p):
    # conv1 (k=3, pad=1) lifted to k=5 / pad=2 via zero end-taps, then both
    # branches concatenated along Cout and flattened to an im2col weight with
    # row index k*Cin + c (matching the patch layout built inside the kernel).
    w1p = jnp.pad(p['conv1_w'], ((0, 0), (0, 0), (1, 1)))           # (8,4,5)
    w_comb = jnp.concatenate([w1p, p['conv2_w']], axis=0)           # (16,4,5)
    w_conv = jnp.transpose(w_comb, (2, 1, 0)).reshape(K_MAX * N_CHANNELS,
                                                      N_BRANCH_CH)  # (20,16)
    b_conv = jnp.concatenate([p['conv1_b'], p['conv2_b']])          # (16,)
    gamma = jnp.concatenate([p['bn1_g'], p['bn2_g']])               # (16,)
    beta = jnp.concatenate([p['bn1_b'], p['bn2_b']])                # (16,)

    # Fold the purely-linear classifier head (no nonlinearity between layers):
    #   out = flat @ (W1.T @ W2.T @ W3.T) + (b1 @ W2.T + b2) @ W3.T + b3
    w_head = p['mlp1_w'].T @ p['mlp2_w'].T @ p['out_w'].T           # (64, 6)
    b_head = (p['mlp1_b'] @ p['mlp2_w'].T + p['mlp2_b']) @ p['out_w'].T \
        + p['out_b']                                                # (6,)

    # PyTorch flattens the pooled (B, C, Lp) tensor channel-major (j = c*Lp+l);
    # the kernel flattens L-major (j' = l*C + c).  Permute head weight rows.
    w_head = jnp.transpose(w_head.reshape(N_FILTERS, L_POOL, N_CLASSES),
                           (1, 0, 2)).reshape(FLAT_DIM, N_CLASSES)

    # Pack everything into one (88, 16) f32 slab -> single parameter DMA.
    slab = jnp.zeros((SLAB_ROWS, N_BRANCH_CH), jnp.float32)
    slab = slab.at[_R_WCONV:_R_BCONV, :].set(w_conv)
    slab = slab.at[_R_BCONV, :].set(b_conv)
    slab = slab.at[_R_GAMMA, :].set(gamma)
    slab = slab.at[_R_BETA, :].set(beta)
    slab = slab.at[_R_BHEAD, :N_CLASSES].set(b_head)
    slab = slab.at[_R_WHEAD:SLAB_ROWS, :N_CLASSES].set(w_head)
    return slab


# --------------------------------------------------------------------------
# Pure-JAX reference (independent of the kernel) for a correctness check
# --------------------------------------------------------------------------
def ref_forward(x, p):
    B = x.shape[0]
    x = x.reshape(B, N_CHANNELS, WINDOW_SIZE)

    def conv_relu_bn(x, w, b, g, beta, pad):
        y = jax.lax.conv_general_dilated(
            x, w, window_strides=(1,), padding=[(pad, pad)],
            dimension_numbers=('NCH', 'OIH', 'NCH'))
        y = y + b[None, :, None]
        y = jnp.maximum(y, 0.0)
        mean = jnp.mean(y, axis=(0, 2), keepdims=True)
        var = jnp.mean((y - mean) ** 2, axis=(0, 2), keepdims=True)
        return (g[None, :, None] * (y - mean) / jnp.sqrt(var + BN_EPS)
                + beta[None, :, None])

    y1 = conv_relu_bn(x, p['conv1_w'], p['conv1_b'], p['bn1_g'], p['bn1_b'], 1)
    y2 = conv_relu_bn(x, p['conv2_w'], p['conv2_b'], p['bn2_g'], p['bn2_b'], 2)
    z = y1 + y2
    zp = jnp.maximum(z[:, :, 0::2], z[:, :, 1::2])      # MaxPool1d(2)
    flat = zp.reshape(B, -1)                            # channel-major flatten
    h = flat @ p['mlp1_w'].T + p['mlp1_b']
    h = h @ p['mlp2_w'].T + p['mlp2_b']
    return h @ p['out_w'].T + p['out_b']


# --------------------------------------------------------------------------
# Deterministic parameter init (PyTorch-shaped tensors, uniform(-1/sqrt(fan),..))
# --------------------------------------------------------------------------
def init_params(key):
    ks = jax.random.split(key, 10)

    def u(k, shape, fan_in):
        bound = 1.0 / (fan_in ** 0.5)
        return jax.random.uniform(k, shape, jnp.float32, -bound, bound)

    p = {}
    p['conv1_w'] = u(ks[0], (N_FILTERS, N_CHANNELS, 3), N_CHANNELS * 3)
    p['conv1_b'] = u(ks[1], (N_FILTERS,), N_CHANNELS * 3)
    p['bn1_g'] = jnp.ones((N_FILTERS,), jnp.float32)
    p['bn1_b'] = jnp.zeros((N_FILTERS,), jnp.float32)
    p['conv2_w'] = u(ks[2], (N_FILTERS, N_CHANNELS, 5), N_CHANNELS * 5)
    p['conv2_b'] = u(ks[3], (N_FILTERS,), N_CHANNELS * 5)
    p['bn2_g'] = jnp.ones((N_FILTERS,), jnp.float32)
    p['bn2_b'] = jnp.zeros((N_FILTERS,), jnp.float32)
    p['mlp1_w'] = u(ks[4], (HIDDEN, FLAT_DIM), FLAT_DIM)
    p['mlp1_b'] = u(ks[5], (HIDDEN,), FLAT_DIM)
    p['mlp2_w'] = u(ks[6], (HIDDEN, HIDDEN), HIDDEN)
    p['mlp2_b'] = u(ks[7], (HIDDEN,), HIDDEN)
    p['out_w'] = u(ks[8], (N_CLASSES, HIDDEN), HIDDEN)
    p['out_b'] = u(ks[9], (N_CLASSES,), HIDDEN)
    return p


if __name__ == "__main__":
    key = jax.random.PRNGKey(0)
    k_x, k_p = jax.random.split(key)
    params = init_params(k_p)
    slab = prepare_params(params)              # one-time layout work, outside jit
    x = jax.random.normal(k_x, (2, N_CHANNELS, WINDOW_SIZE), jnp.float32)

    fwd = jax.jit(nasnet_forward)
    out = jax.block_until_ready(fwd(x, slab))

    ref = ref_forward(x, params)
    assert out.shape == (2, N_CLASSES), out.shape
    err = float(jnp.max(jnp.abs(out - ref)))
    assert jnp.allclose(out, ref, rtol=1e-3, atol=1e-3), f"max abs err {err}"
    print("KERNEL_OK")
</pallas_src>

<mosaic_0001>
module attributes {stable_mosaic.version = 11 : i64} {
  func.func @nasnet_fused_kernel(%arg0: memref<2x4x16xf32, #tpu.memory_space<vmem>>, %arg1: memref<88x16xf32, #tpu.memory_space<vmem>>, %arg2: memref<2x6xf32, #tpu.memory_space<vmem>>) attributes {dimension_semantics = [], scalar_prefetch = 0 : i64, scratch_operands = 0 : i64, tpu.core_type = #tpu.core_type<tc>} {
    %c0 = arith.constant 0 : index
    %c0_0 = arith.constant 0 : index
    %0 = vector.load %arg1[%c0, %c0_0] : memref<88x16xf32, #tpu.memory_space<vmem>>, vector<20x16xf32>
    %c20 = arith.constant 20 : index
    %c0_1 = arith.constant 0 : index
    %1 = vector.load %arg1[%c20, %c0_1] : memref<88x16xf32, #tpu.memory_space<vmem>>, vector<1x16xf32>
    %c21 = arith.constant 21 : index
    %c0_2 = arith.constant 0 : index
    %2 = vector.load %arg1[%c21, %c0_2] : memref<88x16xf32, #tpu.memory_space<vmem>>, vector<1x16xf32>
    %c22 = arith.constant 22 : index
    %c0_3 = arith.constant 0 : index
    %3 = vector.load %arg1[%c22, %c0_3] : memref<88x16xf32, #tpu.memory_space<vmem>>, vector<1x16xf32>
    %c23 = arith.constant 23 : index
    %c0_4 = arith.constant 0 : index
    %4 = vector.load %arg1[%c23, %c0_4] : memref<88x16xf32, #tpu.memory_space<vmem>>, vector<1x16xf32>
    %c24 = arith.constant 24 : index
    %c0_5 = arith.constant 0 : index
    %5 = vector.load %arg1[%c24, %c0_5] : memref<88x16xf32, #tpu.memory_space<vmem>>, vector<64x16xf32>
    %cst = arith.constant 0.000000e+00 : f32
    %6 = vector.broadcast %cst : f32 to vector<2x4x2xf32>
    %c0_6 = arith.constant 0 : index
    %c0_7 = arith.constant 0 : index
    %c0_8 = arith.constant 0 : index
    %7 = vector.load %arg0[%c0_6, %c0_7, %c0_8] : memref<2x4x16xf32, #tpu.memory_space<vmem>>, vector<2x4x16xf32>
    %8 = tpu.concatenate %6, %7, %6 in 2 : vector<2x4x2xf32>, vector<2x4x16xf32>, vector<2x4x2xf32> -> vector<2x4x20xf32>
    %9 = tpu.transpose %8, [0, 2, 1] : vector<2x4x20xf32> -> vector<2x20x4xf32>
    %10 = vector.extract_strided_slice %9 {offsets = [0, 0, 0], sizes = [2, 16, 4], strides = [1, 1, 1]} : vector<2x20x4xf32> to vector<2x16x4xf32>
    %11 = vector.extract_strided_slice %9 {offsets = [0, 1, 0], sizes = [2, 16, 4], strides = [1, 1, 1]} : vector<2x20x4xf32> to vector<2x16x4xf32>
    %12 = vector.extract_strided_slice %9 {offsets = [0, 2, 0], sizes = [2, 16, 4], strides = [1, 1, 1]} : vector<2x20x4xf32> to vector<2x16x4xf32>
    %13 = vector.extract_strided_slice %9 {offsets = [0, 3, 0], sizes = [2, 16, 4], strides = [1, 1, 1]} : vector<2x20x4xf32> to vector<2x16x4xf32>
    %14 = vector.extract_strided_slice %9 {offsets = [0, 4, 0], sizes = [2, 16, 4], strides = [1, 1, 1]} : vector<2x20x4xf32> to vector<2x16x4xf32>
    %15 = tpu.concatenate %10, %11, %12, %13, %14 in 2 : vector<2x16x4xf32>, vector<2x16x4xf32>, vector<2x16x4xf32>, vector<2x16x4xf32>, vector<2x16x4xf32> -> vector<2x16x20xf32>
    %16 = vector.shape_cast %15 : vector<2x16x20xf32> to vector<32x20xf32>
    %cst_9 = arith.constant dense<0.000000e+00> : vector<32x16xf32>
    %17 = tpu.matmul %16, %0, %cst_9 {dimension_numbers = #tpu.dot_dimension_numbers<[1], [0], [0], [1], [0, 0, 1, 1], [], []>} : vector<32x20xf32>, vector<20x16xf32>, vector<32x16xf32> -> vector<32x16xf32>
    %18 = vector.broadcast %1 : vector<1x16xf32> to vector<32x16xf32>
    %19 = arith.addf %17, %18 : vector<32x16xf32>
    %cst_10 = arith.constant 0.000000e+00 : f32
    %20 = vector.broadcast %cst_10 : f32 to vector<32x16xf32>
    %21 = arith.maximumf %19, %20 : vector<32x16xf32>
    %cst_11 = arith.constant dense<0.000000e+00> : vector<16xf32>
    %22 = vector.multi_reduction <add>, %21, %cst_11 [0] : vector<32x16xf32> to vector<16xf32>
    %23 = vector.shape_cast %22 : vector<16xf32> to vector<1x16xf32>
    %24 = arith.mulf %21, %21 : vector<32x16xf32>
    %cst_12 = arith.constant dense<0.000000e+00> : vector<16xf32>
    %25 = vector.multi_reduction <add>, %24, %cst_12 [0] : vector<32x16xf32> to vector<16xf32>
    %26 = vector.shape_cast %25 : vector<16xf32> to vector<1x16xf32>
    %cst_13 = arith.constant 3.200000e+01 : f32
    %27 = vector.broadcast %cst_13 : f32 to vector<1x16xf32>
    %28 = arith.divf %23, %27 : vector<1x16xf32>
    %cst_14 = arith.constant 3.200000e+01 : f32
    %29 = vector.broadcast %cst_14 : f32 to vector<1x16xf32>
    %30 = arith.divf %26, %29 : vector<1x16xf32>
    %31 = arith.mulf %28, %28 : vector<1x16xf32>
    %32 = arith.subf %30, %31 : vector<1x16xf32>
    %cst_15 = arith.constant 0.000000e+00 : f32
    %33 = vector.broadcast %cst_15 : f32 to vector<1x16xf32>
    %34 = arith.maximumf %32, %33 : vector<1x16xf32>
    %cst_16 = arith.constant 9.99999974E-6 : f32
    %35 = vector.broadcast %cst_16 : f32 to vector<1x16xf32>
    %36 = arith.addf %34, %35 : vector<1x16xf32>
    %37 = math.rsqrt %36 : vector<1x16xf32>
    %38 = vector.broadcast %28 : vector<1x16xf32> to vector<32x16xf32>
    %39 = arith.subf %21, %38 : vector<32x16xf32>
    %40 = arith.mulf %37, %2 : vector<1x16xf32>
    %41 = vector.broadcast %40 : vector<1x16xf32> to vector<32x16xf32>
    %42 = arith.mulf %39, %41 : vector<32x16xf32>
    %43 = vector.broadcast %3 : vector<1x16xf32> to vector<32x16xf32>
    %44 = arith.addf %42, %43 : vector<32x16xf32>
    %45 = vector.extract_strided_slice %44 {offsets = [0, 0], sizes = [32, 8], strides = [1, 1]} : vector<32x16xf32> to vector<32x8xf32>
    %46 = vector.extract_strided_slice %44 {offsets = [0, 8], sizes = [32, 8], strides = [1, 1]} : vector<32x16xf32> to vector<32x8xf32>
    %47 = arith.addf %45, %46 : vector<32x8xf32>
    %48 = vector.shape_cast %47 : vector<32x8xf32> to vector<2x16x8xf32>
    %49 = vector.extract_strided_slice %48 {offsets = [0, 0, 0], sizes = [2, 1, 8], strides = [1, 1, 1]} : vector<2x16x8xf32> to vector<2x1x8xf32>
    %50 = vector.extract_strided_slice %48 {offsets = [0, 1, 0], sizes = [2, 1, 8], strides = [1, 1, 1]} : vector<2x16x8xf32> to vector<2x1x8xf32>
    %51 = arith.maximumf %49, %50 : vector<2x1x8xf32>
    %52 = vector.extract_strided_slice %48 {offsets = [0, 2, 0], sizes = [2, 1, 8], strides = [1, 1, 1]} : vector<2x16x8xf32> to vector<2x1x8xf32>
    %53 = vector.extract_strided_slice %48 {offsets = [0, 3, 0], sizes = [2, 1, 8], strides = [1, 1, 1]} : vector<2x16x8xf32> to vector<2x1x8xf32>
    %54 = arith.maximumf %52, %53 : vector<2x1x8xf32>
    %55 = vector.extract_strided_slice %48 {offsets = [0, 4, 0], sizes = [2, 1, 8], strides = [1, 1, 1]} : vector<2x16x8xf32> to vector<2x1x8xf32>
    %56 = vector.extract_strided_slice %48 {offsets = [0, 5, 0], sizes = [2, 1, 8], strides = [1, 1, 1]} : vector<2x16x8xf32> to vector<2x1x8xf32>
    %57 = arith.maximumf %55, %56 : vector<2x1x8xf32>
    %58 = vector.extract_strided_slice %48 {offsets = [0, 6, 0], sizes = [2, 1, 8], strides = [1, 1, 1]} : vector<2x16x8xf32> to vector<2x1x8xf32>
    %59 = vector.extract_strided_slice %48 {offsets = [0, 7, 0], sizes = [2, 1, 8], strides = [1, 1, 1]} : vector<2x16x8xf32> to vector<2x1x8xf32>
    %60 = arith.maximumf %58, %59 : vector<2x1x8xf32>
    %61 = vector.extract_strided_slice %48 {offsets = [0, 8, 0], sizes = [2, 1, 8], strides = [1, 1, 1]} : vector<2x16x8xf32> to vector<2x1x8xf32>
    %62 = vector.extract_strided_slice %48 {offsets = [0, 9, 0], sizes = [2, 1, 8], strides = [1, 1, 1]} : vector<2x16x8xf32> to vector<2x1x8xf32>
    %63 = arith.maximumf %61, %62 : vector<2x1x8xf32>
    %64 = vector.extract_strided_slice %48 {offsets = [0, 10, 0], sizes = [2, 1, 8], strides = [1, 1, 1]} : vector<2x16x8xf32> to vector<2x1x8xf32>
    %65 = vector.extract_strided_slice %48 {offsets = [0, 11, 0], sizes = [2, 1, 8], strides = [1, 1, 1]} : vector<2x16x8xf32> to vector<2x1x8xf32>
    %66 = arith.maximumf %64, %65 : vector<2x1x8xf32>
    %67 = vector.extract_strided_slice %48 {offsets = [0, 12, 0], sizes = [2, 1, 8], strides = [1, 1, 1]} : vector<2x16x8xf32> to vector<2x1x8xf32>
    %68 = vector.extract_strided_slice %48 {offsets = [0, 13, 0], sizes = [2, 1, 8], strides = [1, 1, 1]} : vector<2x16x8xf32> to vector<2x1x8xf32>
    %69 = arith.maximumf %67, %68 : vector<2x1x8xf32>
    %70 = vector.extract_strided_slice %48 {offsets = [0, 14, 0], sizes = [2, 1, 8], strides = [1, 1, 1]} : vector<2x16x8xf32> to vector<2x1x8xf32>
    %71 = vector.extract_strided_slice %48 {offsets = [0, 15, 0], sizes = [2, 1, 8], strides = [1, 1, 1]} : vector<2x16x8xf32> to vector<2x1x8xf32>
    %72 = arith.maximumf %70, %71 : vector<2x1x8xf32>
    %73 = tpu.concatenate %51, %54, %57, %60, %63, %66, %69, %72 in 2 : vector<2x1x8xf32>, vector<2x1x8xf32>, vector<2x1x8xf32>, vector<2x1x8xf32>, vector<2x1x8xf32>, vector<2x1x8xf32>, vector<2x1x8xf32>, vector<2x1x8xf32> -> vector<2x1x64xf32>
    %cst_17 = arith.constant dense<0.000000e+00> : vector<2x64xf32>
    %74 = vector.multi_reduction <add>, %73, %cst_17 [1] : vector<2x1x64xf32> to vector<2x64xf32>
    %cst_18 = arith.constant dense<0.000000e+00> : vector<2x16xf32>
    %75 = tpu.matmul %74, %5, %cst_18 {dimension_numbers = #tpu.dot_dimension_numbers<[1], [0], [0], [1], [0, 0, 1, 1], [], []>} : vector<2x64xf32>, vector<64x16xf32>, vector<2x16xf32> -> vector<2x16xf32>
    %76 = vector.broadcast %4 : vector<1x16xf32> to vector<2x16xf32>
    %77 = arith.addf %75, %76 : vector<2x16xf32>
    %78 = vector.extract_strided_slice %77 {offsets = [0, 0], sizes = [2, 6], strides = [1, 1]} : vector<2x16xf32> to vector<2x6xf32>
    %c0_19 = arith.constant 0 : index
    %c0_20 = arith.constant 0 : index
    %79 = vector.load %arg2[%c0_19, %c0_20] : memref<2x6xf32, #tpu.memory_space<vmem>>, vector<2x6xf32>
    tpu.vector_store %arg2[%c0_19, %c0_20], %78 {strides = array<i32>} : memref<2x6xf32, #tpu.memory_space<vmem>>, vector<2x6xf32>,
    return
  }
}

</mosaic_0001>

<llo_original>
// kernel: nasnet_forward.1
$region0: #{nasnet_forward.1}
  #allocation0 [shape = 'u32[]', space=smem, size = 0x4, offset = 0x4, fixed_abs, tag = 'smem constant byte address 0x4 - core index']
  #allocation1 [shape = 'u32[144,128]{1,0:T(1,128)}', space=vmem, size = 0x12000, scoped, tag = 'internal scratch']
  %s0 = inlined_call_operand.vmem [shape: f32[2,4,16], index: 0, kind: input, shape index: {}]
  %s1 = inlined_call_operand.vmem [shape: f32[88,16], index: 1, kind: input, shape index: {}]
  %s2 = inlined_call_operand.hbm [shape: f32[2,6], index: 2, kind: output, shape index: {}]
  %s3 = sld [smem:[#allocation0]]
  $region18: #{nasnet_forward.1} parent=0
    _
  %s5 = ssub.s32 1, %s3
  %s6 = scalar_select 0, %s5, %s3
  $region1: #{nasnet_forward.1} parent=0
    #allocation2 [shape = 'u8[1024]{0}', space=vmem, size = 0x400, scoped, tag = 'output window, operand 0, single buffered']
    #allocation3 [shape = 's32[1]{0}', space=sflag, size = 0x4, scoped, tag = 'scoped memory for nasnet_forward.1']
    %7 = vsyncpa [#allocation3], 0
    // Predicated region
    $region2: #{nasnet_forward.1} parent=1 // pred_check
      _
    $region3: #{nasnet_forward.1} parent=1 // pred_check_branch
      %9 = sbr.rel (0) target = $region5
    $region4: #{nasnet_forward.1} parent=1 // pred_region
      _
    $region5: #{nasnet_forward.1} parent=1 // pred_fallthru
      _
    // Predicated region
    $region6: #{nasnet_forward.1} parent=1 // pred_check
      _
    $region7: #{nasnet_forward.1} parent=1 // pred_check_branch
      %11 = sbr.rel (0) target = $region9
    $region8: #{nasnet_forward.1} parent=1 // pred_region
      _
    $region9: #{nasnet_forward.1} parent=1 // pred_fallthru
      _
    %v12 = vld [vmem:[%s1] sm:$0xff]
    %v13 = vld [vmem:[%s1 + $0x8] sm:$0xff]
    %v14 = vld [vmem:[%s1 + $0x10] sm:$0xf]
    %v15 = vld [vmem:[%s1 + $0x14] sm:$0x1]
    %v16 = vld [vmem:[%s1 + $0x15] sm:$0x1]
    %v17 = vld [vmem:[%s1 + $0x16] sm:$0x1]
    %v18 = vld [vmem:[%s1 + $0x17] sm:$0x1]
    %v19 = vld [vmem:[%s1 + $0x18] sm:$0xff]
    %v20 = vld [vmem:[%s1 + $0x20] sm:$0xff]
    %v21 = vld [vmem:[%s1 + $0x28] sm:$0xff]
    %v22 = vld [vmem:[%s1 + $0x30] sm:$0xff]
    %v23 = vld [vmem:[%s1 + $0x38] sm:$0xff]
    %v24 = vld [vmem:[%s1 + $0x40] sm:$0xff]
    %v25 = vld [vmem:[%s1 + $0x48] sm:$0xff]
    %v26 = vld [vmem:[%s1 + $0x50] sm:$0xff]
    %v27 = vld [vmem:[%s0] sm:$0xf]
    %v28 = vld [vmem:[%s0 + $0x4] sm:$0xf]
    %31 = vrot.lane.b32.xlu0 %v27, 2
    %v32 = vpop.permute.xlu0 %31
    %33 = vrot.lane.b32.xlu0 %v28, 2
    %v34 = vpop.permute.xlu0 %33
    %vm37 = vcmask 15360
    %v38 = vsel %vm37, 0.0, %v32
    %v39 = vsel %vm37, 0.0, %v34
    %vm40 = vcmask 146432
    %v41 = vsel %vm40, %v38, 0.0
    %v42 = vsel %vm40, %v39, 0.0
    %43 = vxpose.xlu0.b32.start [1/16] %v41, 128
    %44 = vxpose.xlu0.b32.cont [2/16] 0.0, 128
    %45 = vxpose.xlu0.b32.cont [3/16] 0.0, 128
    %46 = vxpose.xlu0.b32.cont [4/16] 0.0, 128
    %47 = vxpose.xlu0.b32.cont [5/16] 0.0, 128
    %48 = vxpose.xlu0.b32.cont [6/16] 0.0, 128
    %49 = vxpose.xlu0.b32.cont [7/16] 0.0, 128
    %50 = vxpose.xlu0.b32.cont [8/16] 0.0, 128
    %51 = vxpose.xlu0.b32.cont [9/16] 0.0, 128
    %52 = vxpose.xlu0.b32.cont [10/16] 0.0, 128
    %53 = vxpose.xlu0.b32.cont [11/16] 0.0, 128
    %54 = vxpose.xlu0.b32.cont [12/16] 0.0, 128
    %55 = vxpose.xlu0.b32.cont [13/16] 0.0, 128
    %56 = vxpose.xlu0.b32.cont [14/16] 0.0, 128
    %57 = vxpose.xlu0.b32.cont [15/16] 0.0, 128
    %58 = vxpose.xlu0.b32.end [16/16] 0.0, 128
    %v59 = vpop.trf.xlu0
    %v60 = vpop.trf.xlu0
    %v61 = vpop.trf.xlu0
    %v62 = vpop.trf.xlu0
    %v63 = vpop.trf.xlu0
    %v64 = vpop.trf.xlu0
    %v65 = vpop.trf.xlu0
    %v66 = vpop.trf.xlu0
    %v67 = vpop.trf.xlu0
    %v68 = vpop.trf.xlu0
    %v69 = vpop.trf.xlu0
    %v70 = vpop.trf.xlu0
    %v71 = vpop.trf.xlu0
    %v72 = vpop.trf.xlu0
    %v73 = vpop.trf.xlu0
    %v74 = vpop.trf.xlu0
    %75 = vxpose.xlu0.b32.start [1/16] %v42, 128
    %76 = vxpose.xlu0.b32.cont [2/16] 0.0, 128
    %77 = vxpose.xlu0.b32.cont [3/16] 0.0, 128
    %78 = vxpose.xlu0.b32.cont [4/16] 0.0, 128
    %79 = vxpose.xlu0.b32.cont [5/16] 0.0, 128
    %80 = vxpose.xlu0.b32.cont [6/16] 0.0, 128
    %81 = vxpose.xlu0.b32.cont [7/16] 0.0, 128
    %82 = vxpose.xlu0.b32.cont [8/16] 0.0, 128
    %83 = vxpose.xlu0.b32.cont [9/16] 0.0, 128
    %84 = vxpose.xlu0.b32.cont [10/16] 0.0, 128
    %85 = vxpose.xlu0.b32.cont [11/16] 0.0, 128
    %86 = vxpose.xlu0.b32.cont [12/16] 0.0, 128
    %87 = vxpose.xlu0.b32.cont [13/16] 0.0, 128
    %88 = vxpose.xlu0.b32.cont [14/16] 0.0, 128
    %89 = vxpose.xlu0.b32.cont [15/16] 0.0, 128
    %90 = vxpose.xlu0.b32.end [16/16] 0.0, 128
    %v91 = vpop.trf.xlu0
    %v92 = vpop.trf.xlu0
    %v93 = vpop.trf.xlu0
    %v94 = vpop.trf.xlu0
    %v95 = vpop.trf.xlu0
    %v96 = vpop.trf.xlu0
    %v97 = vpop.trf.xlu0
    %v98 = vpop.trf.xlu0
    %v99 = vpop.trf.xlu0
    %v100 = vpop.trf.xlu0
    %v101 = vpop.trf.xlu0
    %v102 = vpop.trf.xlu0
    %v103 = vpop.trf.xlu0
    %v104 = vpop.trf.xlu0
    %v105 = vpop.trf.xlu0
    %v106 = vpop.trf.xlu0
    %vm113 = vcmask 1046528
    %v114 = vrot.slane %v59, 1
    %v115 = vrot.slane %v60, 1
    %v116 = vsel %vm113, %v114, %v115
    %v117 = vrot.slane %v61, 1
    %v118 = vsel %vm113, %v115, %v117
    %v119 = vrot.slane %v91, 1
    %v120 = vrot.slane %v92, 1
    %v121 = vsel %vm113, %v119, %v120
    %v122 = vrot.slane %v93, 1
    %v123 = vsel %vm113, %v120, %v122
    %124 = vrot.lane.b32.xlu0 %v116, 4
    %v125 = vpop.permute.xlu0 %124
    %126 = vrot.lane.b32.xlu0 %v118, 4
    %v127 = vpop.permute.xlu0 %126
    %128 = vrot.lane.b32.xlu0 %v121, 4
    %v129 = vpop.permute.xlu0 %128
    %130 = vrot.lane.b32.xlu0 %v123, 4
    %v131 = vpop.permute.xlu0 %130
    %vm136 = vcmask 1045504
    %v137 = vrot.slane %v59, 2
    %v138 = vrot.slane %v60, 2
    %v139 = vsel %vm136, %v137, %v138
    %v140 = vrot.slane %v61, 2
    %v141 = vsel %vm136, %v138, %v140
    %v142 = vrot.slane %v91, 2
    %v143 = vrot.slane %v92, 2
    %v144 = vsel %vm136, %v142, %v143
    %v145 = vrot.slane %v93, 2
    %v146 = vsel %vm136, %v143, %v145
    %147 = vrot.lane.b32.xlu0 %v139, 8
    %v148 = vpop.permute.xlu0 %147
    %149 = vrot.lane.b32.xlu0 %v141, 8
    %v150 = vpop.permute.xlu0 %149
    %151 = vrot.lane.b32.xlu0 %v144, 8
    %v152 = vpop.permute.xlu0 %151
    %153 = vrot.lane.b32.xlu0 %v146, 8
    %v154 = vpop.permute.xlu0 %153
    %vm159 = vcmask 1044480
    %v160 = vrot.slane %v59, 3
    %v161 = vrot.slane %v60, 3
    %v162 = vsel %vm159, %v160, %v161
    %v163 = vrot.slane %v61, 3
    %v164 = vsel %vm159, %v161, %v163
    %v165 = vrot.slane %v91, 3
    %v166 = vrot.slane %v92, 3
    %v167 = vsel %vm159, %v165, %v166
    %v168 = vrot.slane %v93, 3
    %v169 = vsel %vm159, %v166, %v168
    %170 = vrot.lane.b32.xlu0 %v162, 12
    %v171 = vpop.permute.xlu0 %170
    %172 = vrot.lane.b32.xlu0 %v164, 12
    %v173 = vpop.permute.xlu0 %172
    %174 = vrot.lane.b32.xlu0 %v167, 12
    %v175 = vpop.permute.xlu0 %174
    %176 = vrot.lane.b32.xlu0 %v169, 12
    %v177 = vpop.permute.xlu0 %176
    %vm182 = vcmask 1043456
    %v183 = vrot.slane %v59, 4
    %v184 = vrot.slane %v60, 4
    %v185 = vsel %vm182, %v183, %v184
    %v186 = vrot.slane %v61, 4
    %v187 = vsel %vm182, %v184, %v186
    %v188 = vrot.slane %v91, 4
    %v189 = vrot.slane %v92, 4
    %v190 = vsel %vm182, %v188, %v189
    %v191 = vrot.slane %v93, 4
    %v192 = vsel %vm182, %v189, %v191
    %193 = vrot.lane.b32.xlu0 %v185, 16
    %v194 = vpop.permute.xlu0 %193
    %195 = vrot.lane.b32.xlu0 %v187, 16
    %v196 = vpop.permute.xlu0 %195
    %197 = vrot.lane.b32.xlu0 %v190, 16
    %v198 = vpop.permute.xlu0 %197
    %199 = vrot.lane.b32.xlu0 %v192, 16
    %v200 = vpop.permute.xlu0 %199
    %vm205 = vcmask 31744
    %v206 = vsel %vm205, %v59, %v125
    %v207 = vsel %vm205, %v60, %v127
    %v208 = vsel %vm205, %v91, %v129
    %v209 = vsel %vm205, %v92, %v131
    %vm210 = vcmask 64512
    %v211 = vsel %vm210, %v206, %v148
    %v212 = vsel %vm210, %v207, %v150
    %v213 = vsel %vm210, %v208, %v152
    %v214 = vsel %vm210, %v209, %v154
    %vm215 = vcmask 97280
    %v216 = vsel %vm215, %v211, %v171
    %v217 = vsel %vm215, %v212, %v173
    %v218 = vsel %vm215, %v213, %v175
    %v219 = vsel %vm215, %v214, %v177
    %vm220 = vcmask 130048
    %v221 = vsel %vm220, %v216, %v194
    %v222 = vsel %vm220, %v217, %v196
    %v223 = vsel %vm220, %v218, %v198
    %v224 = vsel %vm220, %v219, %v200
    %v225 = vlaneseq
    %v226 = vshrl.u32 %v225, 7
    %v227 = vsub.s32 0, %v226
    %v228 = vrot.slane %v15, %v227
    %vm229 = vcmask 162816
    %v231 = vsel %vm229, %v221, 0
    %v234 = vsel %vm229, %v222, 0
    %v237 = vsel %vm229, %v223, 0
    %v240 = vsel %vm229, %v224, 0
    %v243 = vsel %vm182, %v14, 0
    %245 = vmatprep.subr.mxu0 0.0
    %246 = vmatpush1.msra.mxu0 %v12
    %247 = vmatprep.subr.mxu0 0.0
    %248 = vmatpush1.msra.mxu0 %v13
    %249 = vmatprep.subr.mxu0 0.0
    %250 = vmatpush1.msra.mxu0 %v243
    %251 = vmatprep.subr.mxu0 0.0
    %252 = vmatpush1.msra.mxu0 0.0
    %253 = vmatprep.subr.mxu0 0.0
    %254 = vmatpush1.msra.mxu0 0.0
    %255 = vmatprep.subr.mxu0 0.0
    %256 = vmatpush1.msra.mxu0 0.0
    %257 = vmatprep.subr.mxu0 0.0
    %258 = vmatpush1.msra.mxu0 0.0
    %259 = vmatprep.subr.mxu0 0.0
    %260 = vmatpush1.msra.mxu0 0.0
    %261 = vmatprep.subr.mxu0 0.0
    %262 = vmatpush1.msra.mxu0 0.0
    %263 = vmatprep.subr.mxu0 0.0
    %264 = vmatpush1.msra.mxu0 0.0
    %265 = vmatprep.subr.mxu0 0.0
    %266 = vmatpush1.msra.mxu0 0.0
    %267 = vmatprep.subr.mxu0 0.0
    %268 = vmatpush1.msra.mxu0 0.0
    %269 = vmatprep.subr.mxu0 0.0
    %270 = vmatpush1.msra.mxu0 0.0
    %271 = vmatprep.subr.mxu0 0.0
    %272 = vmatpush1.msra.mxu0 0.0
    %273 = vmatprep.subr.mxu0 0.0
    %274 = vmatpush1.msra.mxu0 0.0
    %275 = vmatprep.subr.mxu0 0.0
    %276 = vmatpush1.msra.mxu0 0.0
    %277 = vmatprep.subr.mxu0 0.0
    %278 = vmatpush1.msra.mxu0 0.0
    %279 = vmatprep.subr.mxu0 0.0
    %280 = vmatpush1.msra.mxu0 0.0
    %281 = vmatprep.subr.mxu0 0.0
    %282 = vmatpush1.msra.mxu0 0.0
    %283 = vmatprep.subr.mxu0 0.0
    %284 = vmatpush1.msra.mxu0 0.0
    %285 = vmatprep.subr.mxu0 0.0
    %286 = vmatpush1.msra.mxu0 0.0
    %287 = vmatprep.subr.mxu0 0.0
    %288 = vmatpush1.msra.mxu0 0.0
    %289 = vmatprep.subr.mxu0 0.0
    %290 = vmatpush1.msra.mxu0 0.0
    %291 = vmatprep.subr.mxu0 0.0
    %292 = vmatpush1.msra.mxu0 0.0
    %293 = vmatprep.subr.mxu0 0.0
    %294 = vmatpush1.msra.mxu0 0.0
    %295 = vmatprep.subr.mxu0 0.0
    %296 = vmatpush1.msra.mxu0 0.0
    %297 = vmatprep.subr.mxu0 0.0
    %298 = vmatpush1.msra.mxu0 0.0
    %299 = vmatprep.subr.mxu0 0.0
    %300 = vmatpush1.msra.mxu0 0.0
    %301 = vmatprep.subr.mxu0 0.0
    %302 = vmatpush1.msra.mxu0 0.0
    %303 = vmatprep.subr.mxu0 0.0
    %304 = vmatpush1.msra.mxu0 0.0
    %305 = vmatprep.subr.mxu0 0.0
    %306 = vmatpush1.msra.mxu0 0.0
    %307 = vmatprep.subr.mxu0 0.0
    %308 = vmatpush1.msra.mxu0 0.0
    %309 = vmatprep.mubr.f32.mxu0 0.0
    %310 = vmatmul.mubr.f32.gmra.mrb[0].mxu0 %v231
    %v311 = vpop.f32.mrb[0].mxu0
    %v312 = vadd.f32 %v228, %v311
    %v313 = vpop.f32.mrb[0].mxu0
    %314 = vmatprep.mubr.f32.mxu0 0.0
    %315 = vmatmul.mubr.f32.gmra.mrb[0].mxu0 %v234
    %v316 = vpop.f32.mrb[0].mxu0
    %v317 = vadd.f32 %v228, %v316
    %v318 = vpop.f32.mrb[0].mxu0
    %319 = vmatprep.mubr.f32.mxu0 0.0
    %320 = vmatmul.mubr.f32.gmra.mrb[0].mxu0 %v237
    %v321 = vpop.f32.mrb[0].mxu0
    %v322 = vadd.f32 %v228, %v321
    %v323 = vpop.f32.mrb[0].mxu0
    %324 = vmatprep.mubr.f32.mxu0 0.0
    %325 = vmatmul.mubr.f32.gmra.mrb[0].mxu0 %v240
    %v326 = vpop.f32.mrb[0].mxu0
    %v327 = vadd.f32 %v228, %v326
    %v328 = vpop.f32.mrb[0].mxu0
    %329 = vdwg.mxu0
    %v330 = vmax.f32 %v312, 0.0
    %v331 = vmax.f32 %v317, 0.0
    %v332 = vmax.f32 %v322, 0.0
    %v333 = vmax.f32 %v327, 0.0
    %v334 = vsel %vm220, %v330, 0.0
    %v335 = vsel %vm220, %v331, 0.0
    %v336 = vadd.f32 %v334, %v335
    %v337 = vsel %vm220, %v332, 0.0
    %v338 = vadd.f32 %v336, %v337
    %v339 = vsel %vm220, %v333, 0.0
    %v340 = vadd.f32 %v338, %v339
    %v341 = vrot.slane %v340, 4
    %v342 = vadd.f32 %v340, %v341
    %v343 = vrot.slane %v342, 2
    %v344 = vadd.f32 %v342, %v343
    %v345 = vrot.slane %v344, 1
    %v346 = vadd.f32 %v344, %v345
    %v347 = vmul.f32 %v330, %v330
    %v348 = vmul.f32 %v331, %v331
    %v349 = vmul.f32 %v332, %v332
    %v350 = vmul.f32 %v333, %v333
    %v351 = vsel %vm220, %v347, 0.0
    %v352 = vsel %vm220, %v348, 0.0
    %v353 = vadd.f32 %v351, %v352
    %v354 = vsel %vm220, %v349, 0.0
    %v355 = vadd.f32 %v353, %v354
    %v356 = vsel %vm220, %v350, 0.0
    %v357 = vadd.f32 %v355, %v356
    %v358 = vrot.slane %v357, 4
    %v359 = vadd.f32 %v357, %v358
    %v360 = vrot.slane %v359, 2
    %v361 = vadd.f32 %v359, %v360
    %v362 = vrot.slane %v361, 1
    %v363 = vadd.f32 %v361, %v362
    %v364 = vrcp.pop 32.0
    %v365 = vmul.f32 %v346, %v364
    %v366 = vmul.f32 %v363, %v364
    %v367 = vmul.f32 %v365, %v365
    %v368 = vsub.f32 %v366, %v367
    %v369 = vmax.f32 %v368, 0.0
    %v370 = vadd.f32 %v369, 1e-05
    %v371 = vrsqrt.pop %v370
    %v372 = vsub.f32 %v330, %v365
    %v373 = vsub.f32 %v331, %v365
    %v374 = vsub.f32 %v332, %v365
    %v375 = vsub.f32 %v333, %v365
    %v376 = vmul.f32 %v371, %v16
    %v377 = vlaneseq
    %v378 = vshrl.u32 %v377, 7
    %v379 = vsub.s32 0, %v378
    %v380 = vrot.slane %v376, %v379
    %v381 = vmul.f32 %v372, %v380
    %v382 = vmul.f32 %v373, %v380
    %v383 = vmul.f32 %v374, %v380
    %v384 = vmul.f32 %v375, %v380
    %v385 = vlaneseq
    %v386 = vshrl.u32 %v385, 7
    %v387 = vsub.s32 0, %v386
    %v388 = vrot.slane %v17, %v387
    %v389 = vadd.f32 %v381, %v388
    %v390 = vadd.f32 %v382, %v388
    %v391 = vadd.f32 %v383, %v388
    %v392 = vadd.f32 %v384, %v388
    %397 = vrot.lane.b32.xlu0 %v389, 120
    %v398 = vpop.permute.xlu0 %397
    %399 = vrot.lane.b32.xlu0 %v390, 120
    %v400 = vpop.permute.xlu0 %399
    %401 = vrot.lane.b32.xlu0 %v391, 120
    %v402 = vpop.permute.xlu0 %401
    %403 = vrot.lane.b32.xlu0 %v392, 120
    %v404 = vpop.permute.xlu0 %403
    %v409 = vadd.f32 %v389, %v398
    %v410 = vadd.f32 %v390, %v400
    %v411 = vadd.f32 %v391, %v402
    %v412 = vadd.f32 %v392, %v404
    %v415 = vrot.slane %v409, 1
    %v416 = vrot.slane %v411, 1
    %v419 = vmax.f32 %v409, %v415
    %v420 = vmax.f32 %v411, %v416
    %v423 = vrot.slane %v410, 1
    %v424 = vrot.slane %v412, 1
    %v427 = vmax.f32 %v410, %v423
    %v428 = vmax.f32 %v412, %v424
    %v431 = vrot.slane %v419, 2
    %v432 = vrot.slane %v420, 2
    %433 = vrot.lane.b32.xlu0 %v431, 8
    %v434 = vpop.permute.xlu0 %433
    %435 = vrot.lane.b32.xlu0 %v432, 8
    %v436 = vpop.permute.xlu0 %435
    %v439 = vrot.slane %v419, 4
    %v440 = vrot.slane %v420, 4
    %441 = vrot.lane.b32.xlu0 %v439, 16
    %v442 = vpop.permute.xlu0 %441
    %443 = vrot.lane.b32.xlu0 %v440, 16
    %v444 = vpop.permute.xlu0 %443
    %v447 = vrot.slane %v419, 6
    %v448 = vrot.slane %v420, 6
    %449 = vrot.lane.b32.xlu0 %v447, 24
    %v450 = vpop.permute.xlu0 %449
    %451 = vrot.lane.b32.xlu0 %v448, 24
    %v452 = vpop.permute.xlu0 %451
    %457 = vrot.lane.b32.xlu0 %v427, 32
    %v458 = vpop.permute.xlu0 %457
    %459 = vrot.lane.b32.xlu0 %v428, 32
    %v460 = vpop.permute.xlu0 %459
    %v463 = vrot.slane %v427, 2
    %v464 = vrot.slane %v428, 2
    %465 = vrot.lane.b32.xlu0 %v463, 40
    %v466 = vpop.permute.xlu0 %465
    %467 = vrot.lane.b32.xlu0 %v464, 40
    %v468 = vpop.permute.xlu0 %467
    %v471 = vrot.slane %v427, 4
    %v472 = vrot.slane %v428, 4
    %473 = vrot.lane.b32.xlu0 %v471, 48
    %v474 = vpop.permute.xlu0 %473
    %475 = vrot.lane.b32.xlu0 %v472, 48
    %v476 = vpop.permute.xlu0 %475
    %v479 = vrot.slane %v427, 6
    %v480 = vrot.slane %v428, 6
    %481 = vrot.lane.b32.xlu0 %v479, 56
    %v482 = vpop.permute.xlu0 %481
    %483 = vrot.lane.b32.xlu0 %v480, 56
    %v484 = vpop.permute.xlu0 %483
    %v487 = vsel %vm210, %v419, %v434
    %v488 = vsel %vm210, %v420, %v436
    %v489 = vsel %vm220, %v487, %v442
    %v490 = vsel %vm220, %v488, %v444
    %vm491 = vcmask 195584
    %v492 = vsel %vm491, %v489, %v450
    %v493 = vsel %vm491, %v490, %v452
    %vm494 = vcmask 261120
    %v495 = vsel %vm494, %v492, %v458
    %v496 = vsel %vm494, %v493, %v460
    %vm497 = vcmask 326656
    %v498 = vsel %vm497, %v495, %v466
    %v499 = vsel %vm497, %v496, %v468
    %vm500 = vcmask 392192
    %v501 = vsel %vm500, %v498, %v474
    %v502 = vsel %vm500, %v499, %v476
    %vm503 = vcmask 457728
    %v504 = vsel %vm503, %v501, %v482
    %v505 = vsel %vm503, %v502, %v484
    %v506 = vadd.f32 %v504, 0.0
    %v507 = vadd.f32 %v505, 0.0
    %v508 = vlaneseq
    %v509 = vshrl.u32 %v508, 7
    %v510 = vsub.s32 0, %v509
    %v511 = vrot.slane %v18, %v510
    %v514 = vrot.slane %v507, 7
    %vm515 = vcmask 1041409
    %v516 = vsel %vm515, %v514, %v506
    %vm517 = vcmask 523264
    %v518 = vsel %vm517, %v516, 0
    %520 = vmatprep.subr.mxu0 0.0
    %521 = vmatpush1.msra.mxu0 %v19
    %522 = vmatprep.subr.mxu0 0.0
    %523 = vmatpush1.msra.mxu0 %v20
    %524 = vmatprep.subr.mxu0 0.0
    %525 = vmatpush1.msra.mxu0 %v21
    %526 = vmatprep.subr.mxu0 0.0
    %527 = vmatpush1.msra.mxu0 %v22
    %528 = vmatprep.subr.mxu0 0.0
    %529 = vmatpush1.msra.mxu0 %v23
    %530 = vmatprep.subr.mxu0 0.0
    %531 = vmatpush1.msra.mxu0 %v24
    %532 = vmatprep.subr.mxu0 0.0
    %533 = vmatpush1.msra.mxu0 %v25
    %534 = vmatprep.subr.mxu0 0.0
    %535 = vmatpush1.msra.mxu0 %v26
    %536 = vmatprep.subr.mxu0 0.0
    %537 = vmatpush1.msra.mxu0 0.0
    %538 = vmatprep.subr.mxu0 0.0
    %539 = vmatpush1.msra.mxu0 0.0
    %540 = vmatprep.subr.mxu0 0.0
    %541 = vmatpush1.msra.mxu0 0.0
    %542 = vmatprep.subr.mxu0 0.0
    %543 = vmatpush1.msra.mxu0 0.0
    %544 = vmatprep.subr.mxu0 0.0
    %545 = vmatpush1.msra.mxu0 0.0
    %546 = vmatprep.subr.mxu0 0.0
    %547 = vmatpush1.msra.mxu0 0.0
    %548 = vmatprep.subr.mxu0 0.0
    %549 = vmatpush1.msra.mxu0 0.0
    %550 = vmatprep.subr.mxu0 0.0
    %551 = vmatpush1.msra.mxu0 0.0
    %552 = vmatprep.subr.mxu0 0.0
    %553 = vmatpush1.msra.mxu0 0.0
    %554 = vmatprep.subr.mxu0 0.0
    %555 = vmatpush1.msra.mxu0 0.0
    %556 = vmatprep.subr.mxu0 0.0
    %557 = vmatpush1.msra.mxu0 0.0
    %558 = vmatprep.subr.mxu0 0.0
    %559 = vmatpush1.msra.mxu0 0.0
    %560 = vmatprep.subr.mxu0 0.0
    %561 = vmatpush1.msra.mxu0 0.0
    %562 = vmatprep.subr.mxu0 0.0
    %563 = vmatpush1.msra.mxu0 0.0
    %564 = vmatprep.subr.mxu0 0.0
    %565 = vmatpush1.msra.mxu0 0.0
    %566 = vmatprep.subr.mxu0 0.0
    %567 = vmatpush1.msra.mxu0 0.0
    %568 = vmatprep.subr.mxu0 0.0
    %569 = vmatpush1.msra.mxu0 0.0
    %570 = vmatprep.subr.mxu0 0.0
    %571 = vmatpush1.msra.mxu0 0.0
    %572 = vmatprep.subr.mxu0 0.0
    %573 = vmatpush1.msra.mxu0 0.0
    %574 = vmatprep.subr.mxu0 0.0
    %575 = vmatpush1.msra.mxu0 0.0
    %576 = vmatprep.subr.mxu0 0.0
    %577 = vmatpush1.msra.mxu0 0.0
    %578 = vmatprep.subr.mxu0 0.0
    %579 = vmatpush1.msra.mxu0 0.0
    %580 = vmatprep.subr.mxu0 0.0
    %581 = vmatpush1.msra.mxu0 0.0
    %582 = vmatprep.subr.mxu0 0.0
    %583 = vmatpush1.msra.mxu0 0.0
    %584 = vmatprep.mubr.f32.mxu0 0.0
    %585 = vmatmul.mubr.f32.gmra.mrb[0].mxu0 %v518
    %v586 = vpop.f32.mrb[0].mxu0
    %v587 = vadd.f32 %v511, %v586
    %v588 = vpop.f32.mrb[0].mxu0
    %589 = vdwg.mxu0
    %vm590 = vcmask 41984
    %591 = vst.msk [vmem:[#allocation2] sm:$0x3] %vm590, %v587
    // Predicated region
    $region10: #{nasnet_forward.1} parent=1 // pred_check
      _
    $region11: #{nasnet_forward.1} parent=1 // pred_check_branch
      %593 = sbr.rel (0) target = $region13
    $region12: #{nasnet_forward.1} parent=1 // pred_region
      %s595 = ssub.s32 32, 32
      %596 = vsyncadd [#allocation3], %s595
      %s598 = sshll.u32 [#allocation2], 4
      %s599 = int_to_ptr.vmem [resolvable:$true] %s598
      %601 = dma.vmem_to_hbm [thread:$0]  %s599, 32, %s2, [#allocation3]
    $region13: #{nasnet_forward.1} parent=1 // pred_fallthru
      _
    // Predicated region
    $region14: #{nasnet_forward.1} parent=1 // pred_check
      _
    $region15: #{nasnet_forward.1} parent=1 // pred_check_branch
      %603 = sbr.rel (0) target = $region17
    $region16: #{nasnet_forward.1} parent=1 // pred_region
      %604 = dma.done [#allocation3], 32
    $region17: #{nasnet_forward.1} parent=1 // pred_fallthru
      _
    %605 = vsyncpa [#allocation3], 1

</llo_original>
